<compile_context>
chip_gen: v7x
topology: tpu7x:2x2x1
jax: 0.10.0
libtpu: 0.0.40
codegen_flags: <defaults>
</compile_context>

<pallas_src>
import jax
import jax.numpy as jnp
from jax import lax
from jax.experimental import pallas as pl
from jax.experimental.pallas import tpu as pltpu

# physical constants (match the PyTorch module)
G = 9.8
L = 1.0
M = 1.0
MU = 0.01

_LANE = 128


def inverse_pendulum_dynamic(initial_state, controls, time_simulation, horizon):
    """Run `horizon` discretized pendulum steps inside a single Pallas kernel.

    initial_state: (2, B)       row 0 = theta, row 1 = omega
    controls:      (horizon,)   control[t] used at step t
    """
    dt = float(time_simulation) / float(horizon)
    two, B = initial_state.shape
    assert two == 2
    assert controls.shape == (horizon,)

    # Fold constants (Python floats -> immediates in the kernel).
    a_coef = 1.0 - dt * (MU / (M * L ** 2))   # omega multiplier
    b_coef = dt * (G / L)                     # sin(theta) multiplier
    # Effective per-step control: dt * (1/(m l^2)) * c_t, computed once outside.
    eff_ctrl = (dt / (M * L ** 2)) * controls.astype(jnp.float32)

    # Pad batch to a lane multiple and fold into (sublane, lane) layout.
    Bp = ((B + _LANE - 1) // _LANE) * _LANE
    x = initial_state.astype(jnp.float32)
    if Bp != B:
        x = jnp.pad(x, ((0, 0), (0, Bp - B)))
    SUB = Bp // _LANE
    x = x.reshape(2, SUB, _LANE)

    out_dtype = initial_state.dtype

    def kernel(ctrl_ref, x_ref, o_ref):
        theta0 = x_ref[0]      # (SUB, LANE) f32
        omega0 = x_ref[1]      # (SUB, LANE) f32

        def body(t, carry):
            theta, omega = carry
            c_t = ctrl_ref[t]                              # scalar from SMEM
            new_theta = theta + dt * omega
            new_omega = a_coef * omega + b_coef * jnp.sin(theta) + c_t
            return new_theta, new_omega

        theta, omega = lax.fori_loop(0, horizon, body, (theta0, omega0),
                                     unroll=True)
        # Single lane-dense store of the full (2, SUB, LANE) result.
        o_ref[...] = jnp.stack((theta, omega)).astype(o_ref.dtype)

    out = pl.pallas_call(
        kernel,
        out_shape=jax.ShapeDtypeStruct((2, SUB, _LANE), out_dtype),
        in_specs=[
            pl.BlockSpec(memory_space=pltpu.MemorySpace.SMEM),   # eff_ctrl scalars
            pl.BlockSpec(memory_space=pltpu.MemorySpace.VMEM),   # state
        ],
        out_specs=pl.BlockSpec(memory_space=pltpu.MemorySpace.VMEM),
    )(eff_ctrl, x)

    return out.reshape(2, Bp)[:, :B]


def inverse_pendulum_reference(initial_state, controls, time_simulation, horizon):
    """Pure-JAX reference mirroring the PyTorch Sequential of InversePendulumLayer."""
    dt = float(time_simulation) / float(horizon)
    x = initial_state.astype(jnp.float32)
    for t in range(horizon):
        theta, omega = x[0], x[1]
        new_theta = theta + dt * omega
        new_omega = omega + dt * (
            G / L * jnp.sin(theta) - MU / (M * L ** 2) * omega
            + 1.0 / (M * L ** 2) * controls[t]
        )
        x = jnp.stack((new_theta, new_omega))
    return x.astype(initial_state.dtype)


if __name__ == "__main__":
    key = jax.random.PRNGKey(0)
    k_state, k_ctrl = jax.random.split(key)

    horizon = 8
    time_simulation = 1.0
    B = 128  # batch of pendulums; the original scalar module corresponds to B=1

    # one scalar control per layer (torch.rand -> U[0,1))
    controls = jax.random.uniform(k_ctrl, (horizon,), dtype=jnp.float32)
    # deterministic initial state (theta, omega) per pendulum
    initial_state = jax.random.normal(k_state, (2, B), dtype=jnp.float32)

    out = inverse_pendulum_dynamic(initial_state, controls, time_simulation, horizon)
    out = jax.block_until_ready(out)

    ref = inverse_pendulum_reference(initial_state, controls, time_simulation, horizon)
    assert out.shape == (2, B)
    assert jnp.allclose(out, ref, rtol=1e-5, atol=1e-5), "mismatch vs reference"

    print("KERNEL_OK")
</pallas_src>

<mosaic_0001>
module attributes {stable_mosaic.version = 11 : i64} {
  func.func @kernel(%arg0: memref<8xf32, #tpu.memory_space<smem>>, %arg1: memref<2x1x128xf32, #tpu.memory_space<vmem>>, %arg2: memref<2x1x128xf32, #tpu.memory_space<vmem>>) attributes {dimension_semantics = [], scalar_prefetch = 0 : i64, scratch_operands = 0 : i64, tpu.core_type = #tpu.core_type<tc>} {
    %c0 = arith.constant 0 : index
    %c0_0 = arith.constant 0 : index
    %c0_1 = arith.constant 0 : index
    %0 = vector.load %arg1[%c0, %c0_0, %c0_1] : memref<2x1x128xf32, #tpu.memory_space<vmem>>, vector<1x1x128xf32>
    %1 = vector.shape_cast %0 : vector<1x1x128xf32> to vector<1x128xf32>
    %c1 = arith.constant 1 : index
    %c0_2 = arith.constant 0 : index
    %c0_3 = arith.constant 0 : index
    %2 = vector.load %arg1[%c1, %c0_2, %c0_3] : memref<2x1x128xf32, #tpu.memory_space<vmem>>, vector<1x1x128xf32>
    %3 = vector.shape_cast %2 : vector<1x1x128xf32> to vector<1x128xf32>
    %c0_i32 = arith.constant 0 : i32
    %4 = arith.index_cast %c0_i32 : i32 to index
    %5 = memref.load %arg0[%4] : memref<8xf32, #tpu.memory_space<smem>>
    %cst = arith.constant 1.250000e-01 : f32
    %6 = vector.broadcast %cst : f32 to vector<1x128xf32>
    %7 = arith.mulf %6, %3 : vector<1x128xf32>
    %8 = arith.addf %1, %7 : vector<1x128xf32>
    %cst_4 = arith.constant 0.998749971 : f32
    %9 = vector.broadcast %cst_4 : f32 to vector<1x128xf32>
    %10 = arith.mulf %9, %3 : vector<1x128xf32>
    %11 = math.sin %1 : vector<1x128xf32>
    %cst_5 = arith.constant 1.225000e+00 : f32
    %12 = vector.broadcast %cst_5 : f32 to vector<1x128xf32>
    %13 = arith.mulf %12, %11 : vector<1x128xf32>
    %14 = arith.addf %10, %13 : vector<1x128xf32>
    %15 = vector.broadcast %5 : f32 to vector<1x128xf32>
    %16 = arith.addf %14, %15 : vector<1x128xf32>
    %c1_i32 = arith.constant 1 : i32
    %17 = arith.index_cast %c1_i32 : i32 to index
    %18 = memref.load %arg0[%17] : memref<8xf32, #tpu.memory_space<smem>>
    %cst_6 = arith.constant 1.250000e-01 : f32
    %19 = vector.broadcast %cst_6 : f32 to vector<1x128xf32>
    %20 = arith.mulf %19, %16 : vector<1x128xf32>
    %21 = arith.addf %8, %20 : vector<1x128xf32>
    %cst_7 = arith.constant 0.998749971 : f32
    %22 = vector.broadcast %cst_7 : f32 to vector<1x128xf32>
    %23 = arith.mulf %22, %16 : vector<1x128xf32>
    %24 = math.sin %8 : vector<1x128xf32>
    %cst_8 = arith.constant 1.225000e+00 : f32
    %25 = vector.broadcast %cst_8 : f32 to vector<1x128xf32>
    %26 = arith.mulf %25, %24 : vector<1x128xf32>
    %27 = arith.addf %23, %26 : vector<1x128xf32>
    %28 = vector.broadcast %18 : f32 to vector<1x128xf32>
    %29 = arith.addf %27, %28 : vector<1x128xf32>
    %c2_i32 = arith.constant 2 : i32
    %30 = arith.index_cast %c2_i32 : i32 to index
    %31 = memref.load %arg0[%30] : memref<8xf32, #tpu.memory_space<smem>>
    %cst_9 = arith.constant 1.250000e-01 : f32
    %32 = vector.broadcast %cst_9 : f32 to vector<1x128xf32>
    %33 = arith.mulf %32, %29 : vector<1x128xf32>
    %34 = arith.addf %21, %33 : vector<1x128xf32>
    %cst_10 = arith.constant 0.998749971 : f32
    %35 = vector.broadcast %cst_10 : f32 to vector<1x128xf32>
    %36 = arith.mulf %35, %29 : vector<1x128xf32>
    %37 = math.sin %21 : vector<1x128xf32>
    %cst_11 = arith.constant 1.225000e+00 : f32
    %38 = vector.broadcast %cst_11 : f32 to vector<1x128xf32>
    %39 = arith.mulf %38, %37 : vector<1x128xf32>
    %40 = arith.addf %36, %39 : vector<1x128xf32>
    %41 = vector.broadcast %31 : f32 to vector<1x128xf32>
    %42 = arith.addf %40, %41 : vector<1x128xf32>
    %c3_i32 = arith.constant 3 : i32
    %43 = arith.index_cast %c3_i32 : i32 to index
    %44 = memref.load %arg0[%43] : memref<8xf32, #tpu.memory_space<smem>>
    %cst_12 = arith.constant 1.250000e-01 : f32
    %45 = vector.broadcast %cst_12 : f32 to vector<1x128xf32>
    %46 = arith.mulf %45, %42 : vector<1x128xf32>
    %47 = arith.addf %34, %46 : vector<1x128xf32>
    %cst_13 = arith.constant 0.998749971 : f32
    %48 = vector.broadcast %cst_13 : f32 to vector<1x128xf32>
    %49 = arith.mulf %48, %42 : vector<1x128xf32>
    %50 = math.sin %34 : vector<1x128xf32>
    %cst_14 = arith.constant 1.225000e+00 : f32
    %51 = vector.broadcast %cst_14 : f32 to vector<1x128xf32>
    %52 = arith.mulf %51, %50 : vector<1x128xf32>
    %53 = arith.addf %49, %52 : vector<1x128xf32>
    %54 = vector.broadcast %44 : f32 to vector<1x128xf32>
    %55 = arith.addf %53, %54 : vector<1x128xf32>
    %c4_i32 = arith.constant 4 : i32
    %56 = arith.index_cast %c4_i32 : i32 to index
    %57 = memref.load %arg0[%56] : memref<8xf32, #tpu.memory_space<smem>>
    %cst_15 = arith.constant 1.250000e-01 : f32
    %58 = vector.broadcast %cst_15 : f32 to vector<1x128xf32>
    %59 = arith.mulf %58, %55 : vector<1x128xf32>
    %60 = arith.addf %47, %59 : vector<1x128xf32>
    %cst_16 = arith.constant 0.998749971 : f32
    %61 = vector.broadcast %cst_16 : f32 to vector<1x128xf32>
    %62 = arith.mulf %61, %55 : vector<1x128xf32>
    %63 = math.sin %47 : vector<1x128xf32>
    %cst_17 = arith.constant 1.225000e+00 : f32
    %64 = vector.broadcast %cst_17 : f32 to vector<1x128xf32>
    %65 = arith.mulf %64, %63 : vector<1x128xf32>
    %66 = arith.addf %62, %65 : vector<1x128xf32>
    %67 = vector.broadcast %57 : f32 to vector<1x128xf32>
    %68 = arith.addf %66, %67 : vector<1x128xf32>
    %c5_i32 = arith.constant 5 : i32
    %69 = arith.index_cast %c5_i32 : i32 to index
    %70 = memref.load %arg0[%69] : memref<8xf32, #tpu.memory_space<smem>>
    %cst_18 = arith.constant 1.250000e-01 : f32
    %71 = vector.broadcast %cst_18 : f32 to vector<1x128xf32>
    %72 = arith.mulf %71, %68 : vector<1x128xf32>
    %73 = arith.addf %60, %72 : vector<1x128xf32>
    %cst_19 = arith.constant 0.998749971 : f32
    %74 = vector.broadcast %cst_19 : f32 to vector<1x128xf32>
    %75 = arith.mulf %74, %68 : vector<1x128xf32>
    %76 = math.sin %60 : vector<1x128xf32>
    %cst_20 = arith.constant 1.225000e+00 : f32
    %77 = vector.broadcast %cst_20 : f32 to vector<1x128xf32>
    %78 = arith.mulf %77, %76 : vector<1x128xf32>
    %79 = arith.addf %75, %78 : vector<1x128xf32>
    %80 = vector.broadcast %70 : f32 to vector<1x128xf32>
    %81 = arith.addf %79, %80 : vector<1x128xf32>
    %c6_i32 = arith.constant 6 : i32
    %82 = arith.index_cast %c6_i32 : i32 to index
    %83 = memref.load %arg0[%82] : memref<8xf32, #tpu.memory_space<smem>>
    %cst_21 = arith.constant 1.250000e-01 : f32
    %84 = vector.broadcast %cst_21 : f32 to vector<1x128xf32>
    %85 = arith.mulf %84, %81 : vector<1x128xf32>
    %86 = arith.addf %73, %85 : vector<1x128xf32>
    %cst_22 = arith.constant 0.998749971 : f32
    %87 = vector.broadcast %cst_22 : f32 to vector<1x128xf32>
    %88 = arith.mulf %87, %81 : vector<1x128xf32>
    %89 = math.sin %73 : vector<1x128xf32>
    %cst_23 = arith.constant 1.225000e+00 : f32
    %90 = vector.broadcast %cst_23 : f32 to vector<1x128xf32>
    %91 = arith.mulf %90, %89 : vector<1x128xf32>
    %92 = arith.addf %88, %91 : vector<1x128xf32>
    %93 = vector.broadcast %83 : f32 to vector<1x128xf32>
    %94 = arith.addf %92, %93 : vector<1x128xf32>
    %c7_i32 = arith.constant 7 : i32
    %95 = arith.index_cast %c7_i32 : i32 to index
    %96 = memref.load %arg0[%95] : memref<8xf32, #tpu.memory_space<smem>>
    %cst_24 = arith.constant 1.250000e-01 : f32
    %97 = vector.broadcast %cst_24 : f32 to vector<1x128xf32>
    %98 = arith.mulf %97, %94 : vector<1x128xf32>
    %99 = arith.addf %86, %98 : vector<1x128xf32>
    %cst_25 = arith.constant 0.998749971 : f32
    %100 = vector.broadcast %cst_25 : f32 to vector<1x128xf32>
    %101 = arith.mulf %100, %94 : vector<1x128xf32>
    %102 = math.sin %86 : vector<1x128xf32>
    %cst_26 = arith.constant 1.225000e+00 : f32
    %103 = vector.broadcast %cst_26 : f32 to vector<1x128xf32>
    %104 = arith.mulf %103, %102 : vector<1x128xf32>
    %105 = arith.addf %101, %104 : vector<1x128xf32>
    %106 = vector.broadcast %96 : f32 to vector<1x128xf32>
    %107 = arith.addf %105, %106 : vector<1x128xf32>
    %c8_i32 = arith.constant 8 : i32
    %108 = vector.shape_cast %99 : vector<1x128xf32> to vector<1x1x128xf32>
    %109 = vector.shape_cast %107 : vector<1x128xf32> to vector<1x1x128xf32>
    %110 = tpu.concatenate %108, %109 in 0 : vector<1x1x128xf32>, vector<1x1x128xf32> -> vector<2x1x128xf32>
    %c0_27 = arith.constant 0 : index
    %c0_28 = arith.constant 0 : index
    %c0_29 = arith.constant 0 : index
    %111 = vector.load %arg2[%c0_27, %c0_28, %c0_29] : memref<2x1x128xf32, #tpu.memory_space<vmem>>, vector<2x1x128xf32>
    tpu.vector_store %arg2[%c0_27, %c0_28, %c0_29], %110 {strides = array<i32>} : memref<2x1x128xf32, #tpu.memory_space<vmem>>, vector<2x1x128xf32>,
    return
  }
}

</mosaic_0001>

<llo_original>
// kernel: tpu_custom_call.1
$region0: #{tpu_custom_call.1}
  #allocation0 [shape = 'u32[]', space=smem, size = 0x4, offset = 0x4, fixed_abs, tag = 'smem constant byte address 0x4 - core index']
  #allocation1 [shape = 'u32[144,128]{1,0:T(1,128)}', space=vmem, size = 0x12000, scoped, tag = 'internal scratch']
  %s0 = inlined_call_operand.hbm [shape: f32[8], index: 0, kind: input, shape index: {}]
  %s1 = inlined_call_operand.vmem [shape: f32[2,1,128], index: 1, kind: input, shape index: {}]
  %s2 = inlined_call_operand.hbm [shape: f32[2,1,128], index: 2, kind: output, shape index: {}]
  %s3 = sld [smem:[#allocation0]]
  $region22: #{tpu_custom_call.1} parent=0
    _
  %s5 = ssub.s32 1, %s3
  %s6 = scalar_select 0, %s5, %s3
  $region1: #{tpu_custom_call.1} parent=0
    #allocation2 [shape = 'u8[512]{0}', space=smem, size = 0x200, scoped, tag = 'input window, operand 0, single buffered']
    #allocation3 [shape = 's32[1]{0}', space=sflag, size = 0x4, scoped, tag = 'scoped memory for tpu_custom_call.1']
    #allocation4 [shape = 's32[1]{0}', space=sflag, size = 0x4, scoped, tag = 'scoped memory for tpu_custom_call.1']
    #allocation5 [shape = 'u8[1024]{0}', space=vmem, size = 0x400, scoped, tag = 'output window, operand 0, single buffered']
    %7 = vsyncpa [#allocation4], 0
    %8 = vsyncpa [#allocation3], 0
    // Predicated region
    $region2: #{tpu_custom_call.1} parent=1 // pred_check
      _
    $region3: #{tpu_custom_call.1} parent=1 // pred_check_branch
      %10 = sbr.rel (0) target = $region5
    $region4: #{tpu_custom_call.1} parent=1 // pred_region
      %s12 = ssub.s32 16, 16
      %13 = vsyncadd [#allocation4], %s12
      %16 = dma.hbm_to_smem %s0, 16, [#allocation2], [#allocation4]
    $region5: #{tpu_custom_call.1} parent=1 // pred_fallthru
      _
    // Predicated region
    $region6: #{tpu_custom_call.1} parent=1 // pred_check
      _
    $region7: #{tpu_custom_call.1} parent=1 // pred_check_branch
      %18 = sbr.rel (0) target = $region9
    $region8: #{tpu_custom_call.1} parent=1 // pred_region
      _
    $region9: #{tpu_custom_call.1} parent=1 // pred_fallthru
      _
    // Predicated region
    $region10: #{tpu_custom_call.1} parent=1 // pred_check
      _
    $region11: #{tpu_custom_call.1} parent=1 // pred_check_branch
      %20 = sbr.rel (0) target = $region13
    $region12: #{tpu_custom_call.1} parent=1 // pred_region
      %21 = dma.done [#allocation4], 16
    $region13: #{tpu_custom_call.1} parent=1 // pred_fallthru
      _
    %22 = sfence
    %v23 = vld [vmem:[%s1] sm:$0x1]
    %s24 = scalar_lea.vmem %s1, 1
    %v25 = vld [vmem:[%s24] sm:$0x1]
    %s26 = sld [smem:[#allocation2]]
    %v27 = vmul.f32 %v25, 0.125
    %v28 = vadd.f32 %v23, %v27
    %v29 = vmul.f32 %v25, 0.99875
    %v30 = vand.u32 2147483647, %v23
    %vm31 = vcmp.le.f32.partialorder %v30, 0.7853982
    %vm32 = vcmp.lt.s32.totalorder %v23, 0
    %v33 = vand.u32 %v23, 2139095040
    %v34 = vshrl.u32 %v33, 23
    %v35 = vsub.s32 %v34, 127
    %v36 = vand.u32 2147483647, %v23
    %v37 = vand.u32 %v36, 8388607
    %v38 = vor.u32 %v37, 8388608
    %v39 = vsub.s32 0, %v38
    %v40 = vadd.s32 %v35, 1
    %vm41 = vcmp.gt.s32.totalorder %v40, 0
    %v42 = vsel %vm41, %v40, 0
    %v43 = vshrl.u32 %v42, 5
    %v44 = vand.u32 %v42, 31
    %v45 = vsub.s32 32, %v44
    %v46 = vshrl.u32 683565275, %v45
    %v47 = vshll.u32 683565275, %v44
    %v48 = vshrl.u32 2475754826, %v45
    %v49 = vor.u32 %v47, %v48
    %v50 = vshll.u32 2475754826, %v44
    %v51 = vshrl.u32 2131351028, %v45
    %v52 = vor.u32 %v50, %v51
    %v53 = vshll.u32 2131351028, %v44
    %v54 = vshrl.u32 2102212464, %v45
    %v55 = vor.u32 %v53, %v54
    %v56 = vshll.u32 2102212464, %v44
    %v57 = vshrl.u32 920167782, %v45
    %v58 = vor.u32 %v56, %v57
    %v59 = vshll.u32 920167782, %v44
    %v60 = vshrl.u32 1326507024, %v45
    %v61 = vor.u32 %v59, %v60
    %vm62 = vcmp.lt.s32.totalorder %v43, 1
    %vm63 = vcmp.lt.s32.totalorder %v43, 2
    %vm64 = vcmp.lt.s32.totalorder %v43, 3
    %vm65 = vcmp.lt.s32.totalorder %v43, 4
    %v66 = vsel %vm62, %v46, %v49
    %v67 = vsel %vm65, %v55, 2102212464
    %v68 = vsel %vm64, %v52, %v67
    %v69 = vsel %vm63, %v66, %v68
    %v70 = vsel %vm62, %v49, %v52
    %v71 = vsel %vm65, %v58, 920167782
    %v72 = vsel %vm64, %v55, %v71
    %v73 = vsel %vm63, %v70, %v72
    %v74 = vsel %vm62, %v52, %v55
    %v75 = vsel %vm65, %v61, 1326507024
    %v76 = vsel %vm64, %v58, %v75
    %v77 = vsel %vm63, %v74, %v76
    %v78 = vshll.u32 %v38, 8
    %v79 = vmul.u32.u64.compose %v78, %v77
    %v80 = vextract.low.u32 %v79
    %v81 = vextract.high.u32 %v79
    %v82 = vmul.u32.u64.compose %v78, %v73
    %v83 = vextract.low.u32 %v82
    %v84 = vextract.high.u32 %v82
    %v85 = vmul.u32 %v78, %v69
    %v86 = vadd.s32 %v81, %v83
    %vm87 = vc.u32 %v81, %v83
    %v88 = vadd.s32 %v84, 1
    %v89 = vsel %vm87, %v88, %v84
    %v90 = vadd.s32 %v85, %v89
    %v91 = vadd.s32 %v90, 536870912
    %v92 = vshrl.u32 %v91, 30
    %v93 = vshll.u32 %v92, 30
    %v94 = vsub.s32 %v90, %v93
    %vm95 = vcmp.lt.s32.totalorder %v94, 0
    %v96 = vsub.s32 0, %v94
    %v97 = vsel %vm95, %v96, %v94
    %v98 = vclz %v97
    %v99 = vsub.s32 %v98, 2
    %vm100 = vcmp.gt.s32.totalorder 0, %v99
    %v101 = vsel %vm100, 0, %v99
    %v102 = vsub.s32 32, %v101
    %v103 = vshll.u32 %v94, %v101
    %v104 = vshrl.u32 %v86, %v102
    %v105 = vor.u32 %v103, %v104
    %v106 = vsub.s32 4294967266, %v101
    %v107 = vadd.s32 %v106, 127
    %v108 = vshll.u32 %v107, 23
    %v109 = vor.u32 4788187, %v108
    %v110 = vand.u32 2147483647, %v109
    %v112 = vcvt.s32.f32 %v105
    %v113 = vmul.f32 %v112, %v110
    %v114 = vxor.u32 %v113, 2147483648
    %v115 = vsel %vm32, %v114, %v113
    %v116 = vsub.s32 4, %v92
    %v117 = vsel %vm32, %v116, %v92
    %v118 = vsel %vm31, %v23, %v115
    %v119 = vsel %vm31, 0, %v117
    %v120 = vcosq.f32.pop %v118
    %v121 = vsinq.f32.pop %v118
    %vm122 = vweird.f32 %v23
    %v123 = vadd.s32 %v119, 3
    %v124 = vand.u32 %v123, 3
    %vm125 = vcmp.lt.s32.totalorder %v124, 2
    %vm126 = vcmp.eq.s32.totalorder %v124, 0
    %v127 = vxor.u32 %v121, 2147483648
    %v128 = vsel %vm126, %v120, %v127
    %vm129 = vcmp.eq.s32.totalorder %v124, 2
    %v130 = vxor.u32 %v120, 2147483648
    %v131 = vsel %vm129, %v130, %v121
    %v132 = vsel %vm125, %v128, %v131
    %v133 = vsel %vm122, nan, %v132
    %v134 = vmul.f32 %v133, 1.225
    %v135 = vadd.f32 %v29, %v134
    %v136 = vstv %s26
    %v137 = vadd.f32 %v135, %v136
    %s138 = sld [smem:[#allocation2 + $0x1]]
    %v139 = vmul.f32 %v137, 0.125
    %v140 = vadd.f32 %v28, %v139
    %v141 = vmul.f32 %v137, 0.99875
    %v142 = vand.u32 2147483647, %v28
    %vm143 = vcmp.le.f32.partialorder %v142, 0.7853982
    %vm144 = vcmp.lt.s32.totalorder %v28, 0
    %v145 = vand.u32 %v28, 2139095040
    %v146 = vshrl.u32 %v145, 23
    %v147 = vsub.s32 %v146, 127
    %v148 = vand.u32 2147483647, %v28
    %v149 = vand.u32 %v148, 8388607
    %v150 = vor.u32 %v149, 8388608
    %v151 = vsub.s32 0, %v150
    %v152 = vadd.s32 %v147, 1
    %vm153 = vcmp.gt.s32.totalorder %v152, 0
    %v154 = vsel %vm153, %v152, 0
    %v155 = vshrl.u32 %v154, 5
    %v156 = vand.u32 %v154, 31
    %v157 = vsub.s32 32, %v156
    %v158 = vshrl.u32 683565275, %v157
    %v159 = vshll.u32 683565275, %v156
    %v160 = vshrl.u32 2475754826, %v157
    %v161 = vor.u32 %v159, %v160
    %v162 = vshll.u32 2475754826, %v156
    %v163 = vshrl.u32 2131351028, %v157
    %v164 = vor.u32 %v162, %v163
    %v165 = vshll.u32 2131351028, %v156
    %v166 = vshrl.u32 2102212464, %v157
    %v167 = vor.u32 %v165, %v166
    %v168 = vshll.u32 2102212464, %v156
    %v169 = vshrl.u32 920167782, %v157
    %v170 = vor.u32 %v168, %v169
    %v171 = vshll.u32 920167782, %v156
    %v172 = vshrl.u32 1326507024, %v157
    %v173 = vor.u32 %v171, %v172
    %vm174 = vcmp.lt.s32.totalorder %v155, 1
    %vm175 = vcmp.lt.s32.totalorder %v155, 2
    %vm176 = vcmp.lt.s32.totalorder %v155, 3
    %vm177 = vcmp.lt.s32.totalorder %v155, 4
    %v178 = vsel %vm174, %v158, %v161
    %v179 = vsel %vm177, %v167, 2102212464
    %v180 = vsel %vm176, %v164, %v179
    %v181 = vsel %vm175, %v178, %v180
    %v182 = vsel %vm174, %v161, %v164
    %v183 = vsel %vm177, %v170, 920167782
    %v184 = vsel %vm176, %v167, %v183
    %v185 = vsel %vm175, %v182, %v184
    %v186 = vsel %vm174, %v164, %v167
    %v187 = vsel %vm177, %v173, 1326507024
    %v188 = vsel %vm176, %v170, %v187
    %v189 = vsel %vm175, %v186, %v188
    %v190 = vshll.u32 %v150, 8
    %v191 = vmul.u32.u64.compose %v190, %v189
    %v192 = vextract.low.u32 %v191
    %v193 = vextract.high.u32 %v191
    %v194 = vmul.u32.u64.compose %v190, %v185
    %v195 = vextract.low.u32 %v194
    %v196 = vextract.high.u32 %v194
    %v197 = vmul.u32 %v190, %v181
    %v198 = vadd.s32 %v193, %v195
    %vm199 = vc.u32 %v193, %v195
    %v200 = vadd.s32 %v196, 1
    %v201 = vsel %vm199, %v200, %v196
    %v202 = vadd.s32 %v197, %v201
    %v203 = vadd.s32 %v202, 536870912
    %v204 = vshrl.u32 %v203, 30
    %v205 = vshll.u32 %v204, 30
    %v206 = vsub.s32 %v202, %v205
    %vm207 = vcmp.lt.s32.totalorder %v206, 0
    %v208 = vsub.s32 0, %v206
    %v209 = vsel %vm207, %v208, %v206
    %v210 = vclz %v209
    %v211 = vsub.s32 %v210, 2
    %vm212 = vcmp.gt.s32.totalorder 0, %v211
    %v213 = vsel %vm212, 0, %v211
    %v214 = vsub.s32 32, %v213
    %v215 = vshll.u32 %v206, %v213
    %v216 = vshrl.u32 %v198, %v214
    %v217 = vor.u32 %v215, %v216
    %v218 = vsub.s32 4294967266, %v213
    %v219 = vadd.s32 %v218, 127
    %v220 = vshll.u32 %v219, 23
    %v221 = vor.u32 4788187, %v220
    %v222 = vand.u32 2147483647, %v221
    %v224 = vcvt.s32.f32 %v217
    %v225 = vmul.f32 %v224, %v222
    %v226 = vxor.u32 %v225, 2147483648
    %v227 = vsel %vm144, %v226, %v225
    %v228 = vsub.s32 4, %v204
    %v229 = vsel %vm144, %v228, %v204
    %v230 = vsel %vm143, %v28, %v227
    %v231 = vsel %vm143, 0, %v229
    %v232 = vcosq.f32.pop %v230
    %v233 = vsinq.f32.pop %v230
    %vm234 = vweird.f32 %v28
    %v235 = vadd.s32 %v231, 3
    %v236 = vand.u32 %v235, 3
    %vm237 = vcmp.lt.s32.totalorder %v236, 2
    %vm238 = vcmp.eq.s32.totalorder %v236, 0
    %v239 = vxor.u32 %v233, 2147483648
    %v240 = vsel %vm238, %v232, %v239
    %vm241 = vcmp.eq.s32.totalorder %v236, 2
    %v242 = vxor.u32 %v232, 2147483648
    %v243 = vsel %vm241, %v242, %v233
    %v244 = vsel %vm237, %v240, %v243
    %v245 = vsel %vm234, nan, %v244
    %v246 = vmul.f32 %v245, 1.225
    %v247 = vadd.f32 %v141, %v246
    %v248 = vstv %s138
    %v249 = vadd.f32 %v247, %v248
    %s250 = sld [smem:[#allocation2 + $0x2]]
    %v251 = vmul.f32 %v249, 0.125
    %v252 = vadd.f32 %v140, %v251
    %v253 = vmul.f32 %v249, 0.99875
    %v254 = vand.u32 2147483647, %v140
    %vm255 = vcmp.le.f32.partialorder %v254, 0.7853982
    %vm256 = vcmp.lt.s32.totalorder %v140, 0
    %v257 = vand.u32 %v140, 2139095040
    %v258 = vshrl.u32 %v257, 23
    %v259 = vsub.s32 %v258, 127
    %v260 = vand.u32 2147483647, %v140
    %v261 = vand.u32 %v260, 8388607
    %v262 = vor.u32 %v261, 8388608
    %v263 = vsub.s32 0, %v262
    %v264 = vadd.s32 %v259, 1
    %vm265 = vcmp.gt.s32.totalorder %v264, 0
    %v266 = vsel %vm265, %v264, 0
    %v267 = vshrl.u32 %v266, 5
    %v268 = vand.u32 %v266, 31
    %v269 = vsub.s32 32, %v268
    %v270 = vshrl.u32 683565275, %v269
    %v271 = vshll.u32 683565275, %v268
    %v272 = vshrl.u32 2475754826, %v269
    %v273 = vor.u32 %v271, %v272
    %v274 = vshll.u32 2475754826, %v268
    %v275 = vshrl.u32 2131351028, %v269
    %v276 = vor.u32 %v274, %v275
    %v277 = vshll.u32 2131351028, %v268
    %v278 = vshrl.u32 2102212464, %v269
    %v279 = vor.u32 %v277, %v278
    %v280 = vshll.u32 2102212464, %v268
    %v281 = vshrl.u32 920167782, %v269
    %v282 = vor.u32 %v280, %v281
    %v283 = vshll.u32 920167782, %v268
    %v284 = vshrl.u32 1326507024, %v269
    %v285 = vor.u32 %v283, %v284
    %vm286 = vcmp.lt.s32.totalorder %v267, 1
    %vm287 = vcmp.lt.s32.totalorder %v267, 2
    %vm288 = vcmp.lt.s32.totalorder %v267, 3
    %vm289 = vcmp.lt.s32.totalorder %v267, 4
    %v290 = vsel %vm286, %v270, %v273
    %v291 = vsel %vm289, %v279, 2102212464
    %v292 = vsel %vm288, %v276, %v291
    %v293 = vsel %vm287, %v290, %v292
    %v294 = vsel %vm286, %v273, %v276
    %v295 = vsel %vm289, %v282, 920167782
    %v296 = vsel %vm288, %v279, %v295
    %v297 = vsel %vm287, %v294, %v296
    %v298 = vsel %vm286, %v276, %v279
    %v299 = vsel %vm289, %v285, 1326507024
    %v300 = vsel %vm288, %v282, %v299
    %v301 = vsel %vm287, %v298, %v300
    %v302 = vshll.u32 %v262, 8
    %v303 = vmul.u32.u64.compose %v302, %v301
    %v304 = vextract.low.u32 %v303
    %v305 = vextract.high.u32 %v303
    %v306 = vmul.u32.u64.compose %v302, %v297
    %v307 = vextract.low.u32 %v306
    %v308 = vextract.high.u32 %v306
    %v309 = vmul.u32 %v302, %v293
    %v310 = vadd.s32 %v305, %v307
    %vm311 = vc.u32 %v305, %v307
    %v312 = vadd.s32 %v308, 1
    %v313 = vsel %vm311, %v312, %v308
    %v314 = vadd.s32 %v309, %v313
    %v315 = vadd.s32 %v314, 536870912
    %v316 = vshrl.u32 %v315, 30
    %v317 = vshll.u32 %v316, 30
    %v318 = vsub.s32 %v314, %v317
    %vm319 = vcmp.lt.s32.totalorder %v318, 0
    %v320 = vsub.s32 0, %v318
    %v321 = vsel %vm319, %v320, %v318
    %v322 = vclz %v321
    %v323 = vsub.s32 %v322, 2
    %vm324 = vcmp.gt.s32.totalorder 0, %v323
    %v325 = vsel %vm324, 0, %v323
    %v326 = vsub.s32 32, %v325
    %v327 = vshll.u32 %v318, %v325
    %v328 = vshrl.u32 %v310, %v326
    %v329 = vor.u32 %v327, %v328
    %v330 = vsub.s32 4294967266, %v325
    %v331 = vadd.s32 %v330, 127
    %v332 = vshll.u32 %v331, 23
    %v333 = vor.u32 4788187, %v332
    %v334 = vand.u32 2147483647, %v333
    %v336 = vcvt.s32.f32 %v329
    %v337 = vmul.f32 %v336, %v334
    %v338 = vxor.u32 %v337, 2147483648
    %v339 = vsel %vm256, %v338, %v337
    %v340 = vsub.s32 4, %v316
    %v341 = vsel %vm256, %v340, %v316
    %v342 = vsel %vm255, %v140, %v339
    %v343 = vsel %vm255, 0, %v341
    %v344 = vcosq.f32.pop %v342
    %v345 = vsinq.f32.pop %v342
    %vm346 = vweird.f32 %v140
    %v347 = vadd.s32 %v343, 3
    %v348 = vand.u32 %v347, 3
    %vm349 = vcmp.lt.s32.totalorder %v348, 2
    %vm350 = vcmp.eq.s32.totalorder %v348, 0
    %v351 = vxor.u32 %v345, 2147483648
    %v352 = vsel %vm350, %v344, %v351
    %vm353 = vcmp.eq.s32.totalorder %v348, 2
    %v354 = vxor.u32 %v344, 2147483648
    %v355 = vsel %vm353, %v354, %v345
    %v356 = vsel %vm349, %v352, %v355
    %v357 = vsel %vm346, nan, %v356
    %v358 = vmul.f32 %v357, 1.225
    %v359 = vadd.f32 %v253, %v358
    %v360 = vstv %s250
    %v361 = vadd.f32 %v359, %v360
    %s362 = sld [smem:[#allocation2 + $0x3]]
    %v363 = vmul.f32 %v361, 0.125
    %v364 = vadd.f32 %v252, %v363
    %v365 = vmul.f32 %v361, 0.99875
    %v366 = vand.u32 2147483647, %v252
    %vm367 = vcmp.le.f32.partialorder %v366, 0.7853982
    %vm368 = vcmp.lt.s32.totalorder %v252, 0
    %v369 = vand.u32 %v252, 2139095040
    %v370 = vshrl.u32 %v369, 23
    %v371 = vsub.s32 %v370, 127
    %v372 = vand.u32 2147483647, %v252
    %v373 = vand.u32 %v372, 8388607
    %v374 = vor.u32 %v373, 8388608
    %v375 = vsub.s32 0, %v374
    %v376 = vadd.s32 %v371, 1
    %vm377 = vcmp.gt.s32.totalorder %v376, 0
    %v378 = vsel %vm377, %v376, 0
    %v379 = vshrl.u32 %v378, 5
    %v380 = vand.u32 %v378, 31
    %v381 = vsub.s32 32, %v380
    %v382 = vshrl.u32 683565275, %v381
    %v383 = vshll.u32 683565275, %v380
    %v384 = vshrl.u32 2475754826, %v381
    %v385 = vor.u32 %v383, %v384
    %v386 = vshll.u32 2475754826, %v380
    %v387 = vshrl.u32 2131351028, %v381
    %v388 = vor.u32 %v386, %v387
    %v389 = vshll.u32 2131351028, %v380
    %v390 = vshrl.u32 2102212464, %v381
    %v391 = vor.u32 %v389, %v390
    %v392 = vshll.u32 2102212464, %v380
    %v393 = vshrl.u32 920167782, %v381
    %v394 = vor.u32 %v392, %v393
    %v395 = vshll.u32 920167782, %v380
    %v396 = vshrl.u32 1326507024, %v381
    %v397 = vor.u32 %v395, %v396
    %vm398 = vcmp.lt.s32.totalorder %v379, 1
    %vm399 = vcmp.lt.s32.totalorder %v379, 2
    %vm400 = vcmp.lt.s32.totalorder %v379, 3
    %vm401 = vcmp.lt.s32.totalorder %v379, 4
    %v402 = vsel %vm398, %v382, %v385
    %v403 = vsel %vm401, %v391, 2102212464
    %v404 = vsel %vm400, %v388, %v403
    %v405 = vsel %vm399, %v402, %v404
    %v406 = vsel %vm398, %v385, %v388
    %v407 = vsel %vm401, %v394, 920167782
    %v408 = vsel %vm400, %v391, %v407
    %v409 = vsel %vm399, %v406, %v408
    %v410 = vsel %vm398, %v388, %v391
    %v411 = vsel %vm401, %v397, 1326507024
    %v412 = vsel %vm400, %v394, %v411
    %v413 = vsel %vm399, %v410, %v412
    %v414 = vshll.u32 %v374, 8
    %v415 = vmul.u32.u64.compose %v414, %v413
    %v416 = vextract.low.u32 %v415
    %v417 = vextract.high.u32 %v415
    %v418 = vmul.u32.u64.compose %v414, %v409
    %v419 = vextract.low.u32 %v418
    %v420 = vextract.high.u32 %v418
    %v421 = vmul.u32 %v414, %v405
    %v422 = vadd.s32 %v417, %v419
    %vm423 = vc.u32 %v417, %v419
    %v424 = vadd.s32 %v420, 1
    %v425 = vsel %vm423, %v424, %v420
    %v426 = vadd.s32 %v421, %v425
    %v427 = vadd.s32 %v426, 536870912
    %v428 = vshrl.u32 %v427, 30
    %v429 = vshll.u32 %v428, 30
    %v430 = vsub.s32 %v426, %v429
    %vm431 = vcmp.lt.s32.totalorder %v430, 0
    %v432 = vsub.s32 0, %v430
    %v433 = vsel %vm431, %v432, %v430
    %v434 = vclz %v433
    %v435 = vsub.s32 %v434, 2
    %vm436 = vcmp.gt.s32.totalorder 0, %v435
    %v437 = vsel %vm436, 0, %v435
    %v438 = vsub.s32 32, %v437
    %v439 = vshll.u32 %v430, %v437
    %v440 = vshrl.u32 %v422, %v438
    %v441 = vor.u32 %v439, %v440
    %v442 = vsub.s32 4294967266, %v437
    %v443 = vadd.s32 %v442, 127
    %v444 = vshll.u32 %v443, 23
    %v445 = vor.u32 4788187, %v444
    %v446 = vand.u32 2147483647, %v445
    %v448 = vcvt.s32.f32 %v441
    %v449 = vmul.f32 %v448, %v446
    %v450 = vxor.u32 %v449, 2147483648
    %v451 = vsel %vm368, %v450, %v449
    %v452 = vsub.s32 4, %v428
    %v453 = vsel %vm368, %v452, %v428
    %v454 = vsel %vm367, %v252, %v451
    %v455 = vsel %vm367, 0, %v453
    %v456 = vcosq.f32.pop %v454
    %v457 = vsinq.f32.pop %v454
    %vm458 = vweird.f32 %v252
    %v459 = vadd.s32 %v455, 3
    %v460 = vand.u32 %v459, 3
    %vm461 = vcmp.lt.s32.totalorder %v460, 2
    %vm462 = vcmp.eq.s32.totalorder %v460, 0
    %v463 = vxor.u32 %v457, 2147483648
    %v464 = vsel %vm462, %v456, %v463
    %vm465 = vcmp.eq.s32.totalorder %v460, 2
    %v466 = vxor.u32 %v456, 2147483648
    %v467 = vsel %vm465, %v466, %v457
    %v468 = vsel %vm461, %v464, %v467
    %v469 = vsel %vm458, nan, %v468
    %v470 = vmul.f32 %v469, 1.225
    %v471 = vadd.f32 %v365, %v470
    %v472 = vstv %s362
    %v473 = vadd.f32 %v471, %v472
    %s474 = sld [smem:[#allocation2 + $0x4]]
    %v475 = vmul.f32 %v473, 0.125
    %v476 = vadd.f32 %v364, %v475
    %v477 = vmul.f32 %v473, 0.99875
    %v478 = vand.u32 2147483647, %v364
    %vm479 = vcmp.le.f32.partialorder %v478, 0.7853982
    %vm480 = vcmp.lt.s32.totalorder %v364, 0
    %v481 = vand.u32 %v364, 2139095040
    %v482 = vshrl.u32 %v481, 23
    %v483 = vsub.s32 %v482, 127
    %v484 = vand.u32 2147483647, %v364
    %v485 = vand.u32 %v484, 8388607
    %v486 = vor.u32 %v485, 8388608
    %v487 = vsub.s32 0, %v486
    %v488 = vadd.s32 %v483, 1
    %vm489 = vcmp.gt.s32.totalorder %v488, 0
    %v490 = vsel %vm489, %v488, 0
    %v491 = vshrl.u32 %v490, 5
    %v492 = vand.u32 %v490, 31
    %v493 = vsub.s32 32, %v492
    %v494 = vshrl.u32 683565275, %v493
    %v495 = vshll.u32 683565275, %v492
    %v496 = vshrl.u32 2475754826, %v493
    %v497 = vor.u32 %v495, %v496
    %v498 = vshll.u32 2475754826, %v492
    %v499 = vshrl.u32 2131351028, %v493
    %v500 = vor.u32 %v498, %v499
    %v501 = vshll.u32 2131351028, %v492
    %v502 = vshrl.u32 2102212464, %v493
    %v503 = vor.u32 %v501, %v502
    %v504 = vshll.u32 2102212464, %v492
    %v505 = vshrl.u32 920167782, %v493
    %v506 = vor.u32 %v504, %v505
    %v507 = vshll.u32 920167782, %v492
    %v508 = vshrl.u32 1326507024, %v493
    %v509 = vor.u32 %v507, %v508
    %vm510 = vcmp.lt.s32.totalorder %v491, 1
    %vm511 = vcmp.lt.s32.totalorder %v491, 2
    %vm512 = vcmp.lt.s32.totalorder %v491, 3
    %vm513 = vcmp.lt.s32.totalorder %v491, 4
    %v514 = vsel %vm510, %v494, %v497
    %v515 = vsel %vm513, %v503, 2102212464
    %v516 = vsel %vm512, %v500, %v515
    %v517 = vsel %vm511, %v514, %v516
    %v518 = vsel %vm510, %v497, %v500
    %v519 = vsel %vm513, %v506, 920167782
    %v520 = vsel %vm512, %v503, %v519
    %v521 = vsel %vm511, %v518, %v520
    %v522 = vsel %vm510, %v500, %v503
    %v523 = vsel %vm513, %v509, 1326507024
    %v524 = vsel %vm512, %v506, %v523
    %v525 = vsel %vm511, %v522, %v524
    %v526 = vshll.u32 %v486, 8
    %v527 = vmul.u32.u64.compose %v526, %v525
    %v528 = vextract.low.u32 %v527
    %v529 = vextract.high.u32 %v527
    %v530 = vmul.u32.u64.compose %v526, %v521
    %v531 = vextract.low.u32 %v530
    %v532 = vextract.high.u32 %v530
    %v533 = vmul.u32 %v526, %v517
    %v534 = vadd.s32 %v529, %v531
    %vm535 = vc.u32 %v529, %v531
    %v536 = vadd.s32 %v532, 1
    %v537 = vsel %vm535, %v536, %v532
    %v538 = vadd.s32 %v533, %v537
    %v539 = vadd.s32 %v538, 536870912
    %v540 = vshrl.u32 %v539, 30
    %v541 = vshll.u32 %v540, 30
    %v542 = vsub.s32 %v538, %v541
    %vm543 = vcmp.lt.s32.totalorder %v542, 0
    %v544 = vsub.s32 0, %v542
    %v545 = vsel %vm543, %v544, %v542
    %v546 = vclz %v545
    %v547 = vsub.s32 %v546, 2
    %vm548 = vcmp.gt.s32.totalorder 0, %v547
    %v549 = vsel %vm548, 0, %v547
    %v550 = vsub.s32 32, %v549
    %v551 = vshll.u32 %v542, %v549
    %v552 = vshrl.u32 %v534, %v550
    %v553 = vor.u32 %v551, %v552
    %v554 = vsub.s32 4294967266, %v549
    %v555 = vadd.s32 %v554, 127
    %v556 = vshll.u32 %v555, 23
    %v557 = vor.u32 4788187, %v556
    %v558 = vand.u32 2147483647, %v557
    %v560 = vcvt.s32.f32 %v553
    %v561 = vmul.f32 %v560, %v558
    %v562 = vxor.u32 %v561, 2147483648
    %v563 = vsel %vm480, %v562, %v561
    %v564 = vsub.s32 4, %v540
    %v565 = vsel %vm480, %v564, %v540
    %v566 = vsel %vm479, %v364, %v563
    %v567 = vsel %vm479, 0, %v565
    %v568 = vcosq.f32.pop %v566
    %v569 = vsinq.f32.pop %v566
    %vm570 = vweird.f32 %v364
    %v571 = vadd.s32 %v567, 3
    %v572 = vand.u32 %v571, 3
    %vm573 = vcmp.lt.s32.totalorder %v572, 2
    %vm574 = vcmp.eq.s32.totalorder %v572, 0
    %v575 = vxor.u32 %v569, 2147483648
    %v576 = vsel %vm574, %v568, %v575
    %vm577 = vcmp.eq.s32.totalorder %v572, 2
    %v578 = vxor.u32 %v568, 2147483648
    %v579 = vsel %vm577, %v578, %v569
    %v580 = vsel %vm573, %v576, %v579
    %v581 = vsel %vm570, nan, %v580
    %v582 = vmul.f32 %v581, 1.225
    %v583 = vadd.f32 %v477, %v582
    %v584 = vstv %s474
    %v585 = vadd.f32 %v583, %v584
    %s586 = sld [smem:[#allocation2 + $0x5]]
    %v587 = vmul.f32 %v585, 0.125
    %v588 = vadd.f32 %v476, %v587
    %v589 = vmul.f32 %v585, 0.99875
    %v590 = vand.u32 2147483647, %v476
    %vm591 = vcmp.le.f32.partialorder %v590, 0.7853982
    %vm592 = vcmp.lt.s32.totalorder %v476, 0
    %v593 = vand.u32 %v476, 2139095040
    %v594 = vshrl.u32 %v593, 23
    %v595 = vsub.s32 %v594, 127
    %v596 = vand.u32 2147483647, %v476
    %v597 = vand.u32 %v596, 8388607
    %v598 = vor.u32 %v597, 8388608
    %v599 = vsub.s32 0, %v598
    %v600 = vadd.s32 %v595, 1
    %vm601 = vcmp.gt.s32.totalorder %v600, 0
    %v602 = vsel %vm601, %v600, 0
    %v603 = vshrl.u32 %v602, 5
    %v604 = vand.u32 %v602, 31
    %v605 = vsub.s32 32, %v604
    %v606 = vshrl.u32 683565275, %v605
    %v607 = vshll.u32 683565275, %v604
    %v608 = vshrl.u32 2475754826, %v605
    %v609 = vor.u32 %v607, %v608
    %v610 = vshll.u32 2475754826, %v604
    %v611 = vshrl.u32 2131351028, %v605
    %v612 = vor.u32 %v610, %v611
    %v613 = vshll.u32 2131351028, %v604
    %v614 = vshrl.u32 2102212464, %v605
    %v615 = vor.u32 %v613, %v614
    %v616 = vshll.u32 2102212464, %v604
    %v617 = vshrl.u32 920167782, %v605
    %v618 = vor.u32 %v616, %v617
    %v619 = vshll.u32 920167782, %v604
    %v620 = vshrl.u32 1326507024, %v605
    %v621 = vor.u32 %v619, %v620
    %vm622 = vcmp.lt.s32.totalorder %v603, 1
    %vm623 = vcmp.lt.s32.totalorder %v603, 2
    %vm624 = vcmp.lt.s32.totalorder %v603, 3
    %vm625 = vcmp.lt.s32.totalorder %v603, 4
    %v626 = vsel %vm622, %v606, %v609
    %v627 = vsel %vm625, %v615, 2102212464
    %v628 = vsel %vm624, %v612, %v627
    %v629 = vsel %vm623, %v626, %v628
    %v630 = vsel %vm622, %v609, %v612
    %v631 = vsel %vm625, %v618, 920167782
    %v632 = vsel %vm624, %v615, %v631
    %v633 = vsel %vm623, %v630, %v632
    %v634 = vsel %vm622, %v612, %v615
    %v635 = vsel %vm625, %v621, 1326507024
    %v636 = vsel %vm624, %v618, %v635
    %v637 = vsel %vm623, %v634, %v636
    %v638 = vshll.u32 %v598, 8
    %v639 = vmul.u32.u64.compose %v638, %v637
    %v640 = vextract.low.u32 %v639
    %v641 = vextract.high.u32 %v639
    %v642 = vmul.u32.u64.compose %v638, %v633
    %v643 = vextract.low.u32 %v642
    %v644 = vextract.high.u32 %v642
    %v645 = vmul.u32 %v638, %v629
    %v646 = vadd.s32 %v641, %v643
    %vm647 = vc.u32 %v641, %v643
    %v648 = vadd.s32 %v644, 1
    %v649 = vsel %vm647, %v648, %v644
    %v650 = vadd.s32 %v645, %v649
    %v651 = vadd.s32 %v650, 536870912
    %v652 = vshrl.u32 %v651, 30
    %v653 = vshll.u32 %v652, 30
    %v654 = vsub.s32 %v650, %v653
    %vm655 = vcmp.lt.s32.totalorder %v654, 0
    %v656 = vsub.s32 0, %v654
    %v657 = vsel %vm655, %v656, %v654
    %v658 = vclz %v657
    %v659 = vsub.s32 %v658, 2
    %vm660 = vcmp.gt.s32.totalorder 0, %v659
    %v661 = vsel %vm660, 0, %v659
    %v662 = vsub.s32 32, %v661
    %v663 = vshll.u32 %v654, %v661
    %v664 = vshrl.u32 %v646, %v662
    %v665 = vor.u32 %v663, %v664
    %v666 = vsub.s32 4294967266, %v661
    %v667 = vadd.s32 %v666, 127
    %v668 = vshll.u32 %v667, 23
    %v669 = vor.u32 4788187, %v668
    %v670 = vand.u32 2147483647, %v669
    %v672 = vcvt.s32.f32 %v665
    %v673 = vmul.f32 %v672, %v670
    %v674 = vxor.u32 %v673, 2147483648
    %v675 = vsel %vm592, %v674, %v673
    %v676 = vsub.s32 4, %v652
    %v677 = vsel %vm592, %v676, %v652
    %v678 = vsel %vm591, %v476, %v675
    %v679 = vsel %vm591, 0, %v677
    %v680 = vcosq.f32.pop %v678
    %v681 = vsinq.f32.pop %v678
    %vm682 = vweird.f32 %v476
    %v683 = vadd.s32 %v679, 3
    %v684 = vand.u32 %v683, 3
    %vm685 = vcmp.lt.s32.totalorder %v684, 2
    %vm686 = vcmp.eq.s32.totalorder %v684, 0
    %v687 = vxor.u32 %v681, 2147483648
    %v688 = vsel %vm686, %v680, %v687
    %vm689 = vcmp.eq.s32.totalorder %v684, 2
    %v690 = vxor.u32 %v680, 2147483648
    %v691 = vsel %vm689, %v690, %v681
    %v692 = vsel %vm685, %v688, %v691
    %v693 = vsel %vm682, nan, %v692
    %v694 = vmul.f32 %v693, 1.225
    %v695 = vadd.f32 %v589, %v694
    %v696 = vstv %s586
    %v697 = vadd.f32 %v695, %v696
    %s698 = sld [smem:[#allocation2 + $0x6]]
    %v699 = vmul.f32 %v697, 0.125
    %v700 = vadd.f32 %v588, %v699
    %v701 = vmul.f32 %v697, 0.99875
    %v702 = vand.u32 2147483647, %v588
    %vm703 = vcmp.le.f32.partialorder %v702, 0.7853982
    %vm704 = vcmp.lt.s32.totalorder %v588, 0
    %v705 = vand.u32 %v588, 2139095040
    %v706 = vshrl.u32 %v705, 23
    %v707 = vsub.s32 %v706, 127
    %v708 = vand.u32 2147483647, %v588
    %v709 = vand.u32 %v708, 8388607
    %v710 = vor.u32 %v709, 8388608
    %v711 = vsub.s32 0, %v710
    %v712 = vadd.s32 %v707, 1
    %vm713 = vcmp.gt.s32.totalorder %v712, 0
    %v714 = vsel %vm713, %v712, 0
    %v715 = vshrl.u32 %v714, 5
    %v716 = vand.u32 %v714, 31
    %v717 = vsub.s32 32, %v716
    %v718 = vshrl.u32 683565275, %v717
    %v719 = vshll.u32 683565275, %v716
    %v720 = vshrl.u32 2475754826, %v717
    %v721 = vor.u32 %v719, %v720
    %v722 = vshll.u32 2475754826, %v716
    %v723 = vshrl.u32 2131351028, %v717
    %v724 = vor.u32 %v722, %v723
    %v725 = vshll.u32 2131351028, %v716
    %v726 = vshrl.u32 2102212464, %v717
    %v727 = vor.u32 %v725, %v726
    %v728 = vshll.u32 2102212464, %v716
    %v729 = vshrl.u32 920167782, %v717
    %v730 = vor.u32 %v728, %v729
    %v731 = vshll.u32 920167782, %v716
    %v732 = vshrl.u32 1326507024, %v717
    %v733 = vor.u32 %v731, %v732
    %vm734 = vcmp.lt.s32.totalorder %v715, 1
    %vm735 = vcmp.lt.s32.totalorder %v715, 2
    %vm736 = vcmp.lt.s32.totalorder %v715, 3
    %vm737 = vcmp.lt.s32.totalorder %v715, 4
    %v738 = vsel %vm734, %v718, %v721
    %v739 = vsel %vm737, %v727, 2102212464
    %v740 = vsel %vm736, %v724, %v739
    %v741 = vsel %vm735, %v738, %v740
    %v742 = vsel %vm734, %v721, %v724
    %v743 = vsel %vm737, %v730, 920167782
    %v744 = vsel %vm736, %v727, %v743
    %v745 = vsel %vm735, %v742, %v744
    %v746 = vsel %vm734, %v724, %v727
    %v747 = vsel %vm737, %v733, 1326507024
    %v748 = vsel %vm736, %v730, %v747
    %v749 = vsel %vm735, %v746, %v748
    %v750 = vshll.u32 %v710, 8
    %v751 = vmul.u32.u64.compose %v750, %v749
    %v752 = vextract.low.u32 %v751
    %v753 = vextract.high.u32 %v751
    %v754 = vmul.u32.u64.compose %v750, %v745
    %v755 = vextract.low.u32 %v754
    %v756 = vextract.high.u32 %v754
    %v757 = vmul.u32 %v750, %v741
    %v758 = vadd.s32 %v753, %v755
    %vm759 = vc.u32 %v753, %v755
    %v760 = vadd.s32 %v756, 1
    %v761 = vsel %vm759, %v760, %v756
    %v762 = vadd.s32 %v757, %v761
    %v763 = vadd.s32 %v762, 536870912
    %v764 = vshrl.u32 %v763, 30
    %v765 = vshll.u32 %v764, 30
    %v766 = vsub.s32 %v762, %v765
    %vm767 = vcmp.lt.s32.totalorder %v766, 0
    %v768 = vsub.s32 0, %v766
    %v769 = vsel %vm767, %v768, %v766
    %v770 = vclz %v769
    %v771 = vsub.s32 %v770, 2
    %vm772 = vcmp.gt.s32.totalorder 0, %v771
    %v773 = vsel %vm772, 0, %v771
    %v774 = vsub.s32 32, %v773
    %v775 = vshll.u32 %v766, %v773
    %v776 = vshrl.u32 %v758, %v774
    %v777 = vor.u32 %v775, %v776
    %v778 = vsub.s32 4294967266, %v773
    %v779 = vadd.s32 %v778, 127
    %v780 = vshll.u32 %v779, 23
    %v781 = vor.u32 4788187, %v780
    %v782 = vand.u32 2147483647, %v781
    %v784 = vcvt.s32.f32 %v777
    %v785 = vmul.f32 %v784, %v782
    %v786 = vxor.u32 %v785, 2147483648
    %v787 = vsel %vm704, %v786, %v785
    %v788 = vsub.s32 4, %v764
    %v789 = vsel %vm704, %v788, %v764
    %v790 = vsel %vm703, %v588, %v787
    %v791 = vsel %vm703, 0, %v789
    %v792 = vcosq.f32.pop %v790
    %v793 = vsinq.f32.pop %v790
    %vm794 = vweird.f32 %v588
    %v795 = vadd.s32 %v791, 3
    %v796 = vand.u32 %v795, 3
    %vm797 = vcmp.lt.s32.totalorder %v796, 2
    %vm798 = vcmp.eq.s32.totalorder %v796, 0
    %v799 = vxor.u32 %v793, 2147483648
    %v800 = vsel %vm798, %v792, %v799
    %vm801 = vcmp.eq.s32.totalorder %v796, 2
    %v802 = vxor.u32 %v792, 2147483648
    %v803 = vsel %vm801, %v802, %v793
    %v804 = vsel %vm797, %v800, %v803
    %v805 = vsel %vm794, nan, %v804
    %v806 = vmul.f32 %v805, 1.225
    %v807 = vadd.f32 %v701, %v806
    %v808 = vstv %s698
    %v809 = vadd.f32 %v807, %v808
    %s810 = sld [smem:[#allocation2 + $0x7]]
    %v811 = vmul.f32 %v809, 0.125
    %v812 = vadd.f32 %v700, %v811
    %v813 = vmul.f32 %v809, 0.99875
    %v814 = vand.u32 2147483647, %v700
    %vm815 = vcmp.le.f32.partialorder %v814, 0.7853982
    %vm816 = vcmp.lt.s32.totalorder %v700, 0
    %v817 = vand.u32 %v700, 2139095040
    %v818 = vshrl.u32 %v817, 23
    %v819 = vsub.s32 %v818, 127
    %v820 = vand.u32 2147483647, %v700
    %v821 = vand.u32 %v820, 8388607
    %v822 = vor.u32 %v821, 8388608
    %v823 = vsub.s32 0, %v822
    %v824 = vadd.s32 %v819, 1
    %vm825 = vcmp.gt.s32.totalorder %v824, 0
    %v826 = vsel %vm825, %v824, 0
    %v827 = vshrl.u32 %v826, 5
    %v828 = vand.u32 %v826, 31
    %v829 = vsub.s32 32, %v828
    %v830 = vshrl.u32 683565275, %v829
    %v831 = vshll.u32 683565275, %v828
    %v832 = vshrl.u32 2475754826, %v829
    %v833 = vor.u32 %v831, %v832
    %v834 = vshll.u32 2475754826, %v828
    %v835 = vshrl.u32 2131351028, %v829
    %v836 = vor.u32 %v834, %v835
    %v837 = vshll.u32 2131351028, %v828
    %v838 = vshrl.u32 2102212464, %v829
    %v839 = vor.u32 %v837, %v838
    %v840 = vshll.u32 2102212464, %v828
    %v841 = vshrl.u32 920167782, %v829
    %v842 = vor.u32 %v840, %v841
    %v843 = vshll.u32 920167782, %v828
    %v844 = vshrl.u32 1326507024, %v829
    %v845 = vor.u32 %v843, %v844
    %vm846 = vcmp.lt.s32.totalorder %v827, 1
    %vm847 = vcmp.lt.s32.totalorder %v827, 2
    %vm848 = vcmp.lt.s32.totalorder %v827, 3
    %vm849 = vcmp.lt.s32.totalorder %v827, 4
    %v850 = vsel %vm846, %v830, %v833
    %v851 = vsel %vm849, %v839, 2102212464
    %v852 = vsel %vm848, %v836, %v851
    %v853 = vsel %vm847, %v850, %v852
    %v854 = vsel %vm846, %v833, %v836
    %v855 = vsel %vm849, %v842, 920167782
    %v856 = vsel %vm848, %v839, %v855
    %v857 = vsel %vm847, %v854, %v856
    %v858 = vsel %vm846, %v836, %v839
    %v859 = vsel %vm849, %v845, 1326507024
    %v860 = vsel %vm848, %v842, %v859
    %v861 = vsel %vm847, %v858, %v860
    %v862 = vshll.u32 %v822, 8
    %v863 = vmul.u32.u64.compose %v862, %v861
    %v864 = vextract.low.u32 %v863
    %v865 = vextract.high.u32 %v863
    %v866 = vmul.u32.u64.compose %v862, %v857
    %v867 = vextract.low.u32 %v866
    %v868 = vextract.high.u32 %v866
    %v869 = vmul.u32 %v862, %v853
    %v870 = vadd.s32 %v865, %v867
    %vm871 = vc.u32 %v865, %v867
    %v872 = vadd.s32 %v868, 1
    %v873 = vsel %vm871, %v872, %v868
    %v874 = vadd.s32 %v869, %v873
    %v875 = vadd.s32 %v874, 536870912
    %v876 = vshrl.u32 %v875, 30
    %v877 = vshll.u32 %v876, 30
    %v878 = vsub.s32 %v874, %v877
    %vm879 = vcmp.lt.s32.totalorder %v878, 0
    %v880 = vsub.s32 0, %v878
    %v881 = vsel %vm879, %v880, %v878
    %v882 = vclz %v881
    %v883 = vsub.s32 %v882, 2
    %vm884 = vcmp.gt.s32.totalorder 0, %v883
    %v885 = vsel %vm884, 0, %v883
    %v886 = vsub.s32 32, %v885
    %v887 = vshll.u32 %v878, %v885
    %v888 = vshrl.u32 %v870, %v886
    %v889 = vor.u32 %v887, %v888
    %v890 = vsub.s32 4294967266, %v885
    %v891 = vadd.s32 %v890, 127
    %v892 = vshll.u32 %v891, 23
    %v893 = vor.u32 4788187, %v892
    %v894 = vand.u32 2147483647, %v893
    %v896 = vcvt.s32.f32 %v889
    %v897 = vmul.f32 %v896, %v894
    %v898 = vxor.u32 %v897, 2147483648
    %v899 = vsel %vm816, %v898, %v897
    %v900 = vsub.s32 4, %v876
    %v901 = vsel %vm816, %v900, %v876
    %v902 = vsel %vm815, %v700, %v899
    %v903 = vsel %vm815, 0, %v901
    %v904 = vcosq.f32.pop %v902
    %v905 = vsinq.f32.pop %v902
    %vm906 = vweird.f32 %v700
    %v907 = vadd.s32 %v903, 3
    %v908 = vand.u32 %v907, 3
    %vm909 = vcmp.lt.s32.totalorder %v908, 2
    %vm910 = vcmp.eq.s32.totalorder %v908, 0
    %v911 = vxor.u32 %v905, 2147483648
    %v912 = vsel %vm910, %v904, %v911
    %vm913 = vcmp.eq.s32.totalorder %v908, 2
    %v914 = vxor.u32 %v904, 2147483648
    %v915 = vsel %vm913, %v914, %v905
    %v916 = vsel %vm909, %v912, %v915
    %v917 = vsel %vm906, nan, %v916
    %v918 = vmul.f32 %v917, 1.225
    %v919 = vadd.f32 %v813, %v918
    %v920 = vstv %s810
    %v921 = vadd.f32 %v919, %v920
    %922 = vst [vmem:[#allocation5] sm:$0x1] %v812
    %923 = vst [vmem:[#allocation5 + $0x1] sm:$0x1] %v921
    // Predicated region
    $region14: #{tpu_custom_call.1} parent=1 // pred_check
      _
    $region15: #{tpu_custom_call.1} parent=1 // pred_check_branch
      %925 = sbr.rel (0) target = $region17
    $region16: #{tpu_custom_call.1} parent=1 // pred_region
      %s927 = ssub.s32 32, 32
      %928 = vsyncadd [#allocation3], %s927
      %s929 = sshll.u32 [#allocation5], 4
      %s930 = int_to_ptr.vmem [resolvable:$true] %s929
      %935 = dma.vmem_to_hbm [thread:$0]  %s930, 32, %s2, [#allocation3], 16, 16, 1
    $region17: #{tpu_custom_call.1} parent=1 // pred_fallthru
      _
    // Predicated region
    $region18: #{tpu_custom_call.1} parent=1 // pred_check
      _
    $region19: #{tpu_custom_call.1} parent=1 // pred_check_branch
      %937 = sbr.rel (0) target = $region21
    $region20: #{tpu_custom_call.1} parent=1 // pred_region
      %938 = dma.done [#allocation3], 32
    $region21: #{tpu_custom_call.1} parent=1 // pred_fallthru
      _
    %939 = vsyncpa [#allocation3], 1
    %940 = vsyncpa [#allocation4], 1

</llo_original>
